<compile_context>
chip_gen: v5e
topology: v5e:2x2
jax: 0.10.0
libtpu: 0.0.40
codegen_flags: <defaults>
</compile_context>

<pallas_src>
import functools

import jax
import jax.numpy as jnp
from jax import lax
from jax.experimental import pallas as pl
from jax.experimental.pallas import tpu as pltpu


# ----------------------------- tiling helpers ------------------------------

_M_PREFS = (512, 256, 128)      # row tiles for the GEMMs
_K_PREFS = (256, 128)           # reduction tiles for the GEMMs
_SEQ_PREFS = (512, 256, 128)    # q-row / kv tiles for attention

# Explicit scoped-VMEM budget: comfortably above what these tiles need, above
# v5e's 16 MiB scoped default, below v7x's 64 MiB physical VMEM.
_VMEM_LIMIT = 48 * 1024 * 1024


def _tile(dim, prefs):
    """Largest preferred tile that evenly divides `dim`, else the full dim."""
    for p in prefs:
        if dim >= p and dim % p == 0:
            return p
    return dim


def _heads_per_block(num_heads, head_dim):
    """Smallest divisor g of num_heads with g*head_dim a multiple of 128
    (lane-dense blocks); falls back to all heads (block == full E)."""
    for g in range(1, num_heads):
        if num_heads % g == 0 and (g * head_dim) % 128 == 0:
            return g
    return num_heads


# ----------------------------- Pallas kernels ------------------------------

def qkv_projection_kernel(x_ref, w_ref, b_ref, q_ref, k_ref, v_ref, acc_ref,
                          *, e_out):
    """Fused Q/K/V projection: one bf16 x tile times one (tk, 3E) bf16 weight
    into a single f32 accumulator; Q/K/V split only at the final store."""
    kk = pl.program_id(1)

    @pl.when(kk == 0)
    def _init():
        acc_ref[...] = jnp.zeros_like(acc_ref)

    x = x_ref[...].astype(jnp.bfloat16)
    acc_ref[...] += jnp.dot(x, w_ref[...], preferred_element_type=jnp.float32)

    @pl.when(kk == pl.num_programs(1) - 1)
    def _store():
        y = acc_ref[...] + b_ref[...]
        q_ref[...] = y[:, :e_out].astype(q_ref.dtype)
        k_ref[...] = y[:, e_out:2 * e_out].astype(k_ref.dtype)
        v_ref[...] = y[:, 2 * e_out:].astype(v_ref.dtype)


def linear_kernel(x_ref, w_ref, b_ref, o_ref, acc_ref):
    """y = x @ w + b with w already transposed to (E_in, E_out) and bf16."""
    kk = pl.program_id(1)

    @pl.when(kk == 0)
    def _init():
        acc_ref[...] = jnp.zeros_like(acc_ref)

    x = x_ref[...].astype(jnp.bfloat16)
    acc_ref[...] += jnp.dot(x, w_ref[...], preferred_element_type=jnp.float32)

    @pl.when(kk == pl.num_programs(1) - 1)
    def _store():
        o_ref[...] = (acc_ref[...] + b_ref[...]).astype(o_ref.dtype)


def attn_kernel(q_ref, k_ref, v_ref, o_ref, m_sc, l_sc, acc_sc, *,
                heads_per_block, head_dim, inv_scale):
    """Flash-style attention for one (batch, head-group, q-tile, kv-tile).

    Refs are (tq, G*D) / (tkv, G*D) bf16.  Online softmax with f32 running
    max / sum / accumulator in VMEM scratch; the post-softmax /sqrt(emb_size)
    is folded exactly into the final per-row normalization.
    """
    kv = pl.program_id(3)

    @pl.when(kv == 0)
    def _init():
        m_sc[...] = jnp.full(m_sc.shape, -jnp.inf, dtype=m_sc.dtype)
        l_sc[...] = jnp.zeros(l_sc.shape, dtype=l_sc.dtype)
        acc_sc[...] = jnp.zeros(acc_sc.shape, dtype=acc_sc.dtype)

    # TODO(synk): for head_dim not a multiple of 128 the per-head lane slices
    #             below are sub-vreg; moving the head split into a 4-D
    #             BlockSpec index_map would turn them into DMA plumbing.
    for h in range(heads_per_block):
        lo = h * head_dim
        hi = lo + head_dim
        q = q_ref[:, lo:hi].astype(jnp.bfloat16)
        k = k_ref[:, lo:hi].astype(jnp.bfloat16)
        v = v_ref[:, lo:hi].astype(jnp.bfloat16)

        # energy[a, b] = sum_d q[a, d] * k[b, d]  (bf16 operands, f32 acc)
        s = lax.dot_general(q, k, (((1,), (1,)), ((), ())),
                            preferred_element_type=jnp.float32)     # (tq, tkv)

        # Online-softmax statistics, all in f32.
        m_prev = m_sc[h]                                            # (tq, 1)
        m_new = jnp.maximum(m_prev, jnp.max(s, axis=-1, keepdims=True))
        alpha = jnp.exp(m_prev - m_new)
        p = jnp.exp(s - m_new)
        l_sc[h] = alpha * l_sc[h] + jnp.sum(p, axis=-1, keepdims=True)

        pv = lax.dot_general(p.astype(jnp.bfloat16), v,
                             (((1,), (0,)), ((), ())),
                             preferred_element_type=jnp.float32)    # (tq, D)
        acc_sc[:, lo:hi] = alpha * acc_sc[:, lo:hi] + pv
        m_sc[h] = m_new

    @pl.when(kv == pl.num_programs(3) - 1)
    def _finalize():
        # Per-row normalization with the post-softmax /sqrt(emb_size) folded
        # in; reciprocal goes to the EUP slot.  Then one dense, lane-wide
        # store of the whole head-group block.
        for h in range(heads_per_block):
            lo = h * head_dim
            hi = lo + head_dim
            inv = inv_scale * pl.reciprocal(l_sc[h], approx=True)   # (tq, 1)
            acc_sc[:, lo:hi] = acc_sc[:, lo:hi] * inv
        o_ref[...] = acc_sc[...].astype(o_ref.dtype)


# ------------------------------ JAX wrappers --------------------------------

def pallas_qkv_projection(x2d, wq, bq, wk, bk, wv, bv):
    """x2d: (M, E) f32.  Weights in nn.Linear layout (E, E).
    Returns q, k, v as (M, E) bf16 (halves downstream attention DMA)."""
    M, E_in = x2d.shape
    E_out = wq.shape[0]

    # One fused [Wq^T | Wk^T | Wv^T] weight, pre-cast to bf16 (native MXU
    # input); bias stays f32 and is added to the f32 accumulator.
    w_cat = jnp.concatenate([wq.T, wk.T, wv.T], axis=1).astype(jnp.bfloat16)
    b_cat = jnp.concatenate([bq, bk, bv]).reshape(1, 3 * E_out)

    tm = _tile(M, _M_PREFS)
    tk = _tile(E_in, _K_PREFS)
    grid = (M // tm, E_in // tk)

    out_sds = jax.ShapeDtypeStruct((M, E_out), jnp.bfloat16)
    kern = functools.partial(qkv_projection_kernel, e_out=E_out)

    # TODO(synk): for very large emb_size the full-width (tm, 3E) accumulator
    #             should be re-tiled along the output axis; fine at ViT sizes.
    q, k, v = pl.pallas_call(
        kern,
        grid_spec=pltpu.PrefetchScalarGridSpec(
            num_scalar_prefetch=0,
            grid=grid,
            in_specs=[
                pl.BlockSpec((tm, tk), lambda i, k: (i, k)),
                pl.BlockSpec((tk, 3 * E_out), lambda i, k: (k, 0)),
                pl.BlockSpec((1, 3 * E_out), lambda i, k: (0, 0)),
            ],
            out_specs=[
                pl.BlockSpec((tm, E_out), lambda i, k: (i, 0)),
                pl.BlockSpec((tm, E_out), lambda i, k: (i, 0)),
                pl.BlockSpec((tm, E_out), lambda i, k: (i, 0)),
            ],
            scratch_shapes=[pltpu.VMEM((tm, 3 * E_out), jnp.float32)],
        ),
        out_shape=(out_sds, out_sds, out_sds),
        compiler_params=pltpu.CompilerParams(
            dimension_semantics=("parallel", "arbitrary"),
            vmem_limit_bytes=_VMEM_LIMIT),
        cost_estimate=pl.CostEstimate(
            flops=2 * M * 3 * E_out * E_in,
            transcendentals=0,
            bytes_accessed=4 * M * E_in + 2 * E_in * 3 * E_out
                           + 2 * 3 * M * E_out),
    )(x2d, w_cat, b_cat)
    return q, k, v


def pallas_linear(x2d, w, b, out_dtype):
    """x2d: (M, E_in) (bf16 or f32), w: (E_out, E_in) nn.Linear layout."""
    M, E_in = x2d.shape
    E_out = w.shape[0]
    w_t = w.T.astype(jnp.bfloat16)   # transpose + downcast once in the wrapper
    b2d = b.reshape(1, E_out)        # bias stays f32

    tm = _tile(M, _M_PREFS)
    tk = _tile(E_in, _K_PREFS)
    grid = (M // tm, E_in // tk)

    return pl.pallas_call(
        linear_kernel,
        grid_spec=pltpu.PrefetchScalarGridSpec(
            num_scalar_prefetch=0,
            grid=grid,
            in_specs=[
                pl.BlockSpec((tm, tk), lambda i, k: (i, k)),
                pl.BlockSpec((tk, E_out), lambda i, k: (k, 0)),
                pl.BlockSpec((1, E_out), lambda i, k: (0, 0)),
            ],
            out_specs=pl.BlockSpec((tm, E_out), lambda i, k: (i, 0)),
            scratch_shapes=[pltpu.VMEM((tm, E_out), jnp.float32)],
        ),
        out_shape=jax.ShapeDtypeStruct((M, E_out), out_dtype),
        compiler_params=pltpu.CompilerParams(
            dimension_semantics=("parallel", "arbitrary"),
            vmem_limit_bytes=_VMEM_LIMIT),
        cost_estimate=pl.CostEstimate(
            flops=2 * M * E_out * E_in,
            transcendentals=0,
            bytes_accessed=2 * M * E_in + 2 * E_in * E_out + 4 * M * E_out),
    )(x2d, w_t, b2d)


def pallas_attention(q, k, v, *, emb_size, num_heads):
    """q, k, v: (B, N, E) bf16 in 'b n (h d)' layout.  Head split is done in
    the BlockSpec index_map (no transposes); output is (B, N, E) bf16."""
    B, N, E = q.shape
    D = E // num_heads
    G = _heads_per_block(num_heads, D)       # heads packed per grid step
    num_groups = num_heads // G
    inv_scale = 1.0 / (float(emb_size) ** 0.5)

    tq = _tile(N, _SEQ_PREFS)
    tkv = _tile(N, _SEQ_PREFS)
    nq = N // tq
    nkv = N // tkv

    kern = functools.partial(attn_kernel, heads_per_block=G, head_dim=D,
                             inv_scale=inv_scale)

    q_spec = pl.BlockSpec((pl.Squeezed(), tq, G * D),
                          lambda b, g, qi, ki: (b, qi, g))
    kv_spec = pl.BlockSpec((pl.Squeezed(), tkv, G * D),
                           lambda b, g, qi, ki: (b, ki, g))
    o_spec = pl.BlockSpec((pl.Squeezed(), tq, G * D),
                          lambda b, g, qi, ki: (b, qi, g))

    # TODO(synk): for B == 1 and num_groups == 1 the only parallel work is the
    #             q-row axis; ensure nq >= 2 there so both v7x TCs are fed.
    return pl.pallas_call(
        kern,
        grid_spec=pltpu.PrefetchScalarGridSpec(
            num_scalar_prefetch=0,
            grid=(B, num_groups, nq, nkv),
            in_specs=[q_spec, kv_spec, kv_spec],
            out_specs=o_spec,
            scratch_shapes=[
                pltpu.VMEM((G, tq, 1), jnp.float32),    # running max per head
                pltpu.VMEM((G, tq, 1), jnp.float32),    # running sum per head
                pltpu.VMEM((tq, G * D), jnp.float32),   # output accumulator
            ],
        ),
        out_shape=jax.ShapeDtypeStruct((B, N, E), q.dtype),
        compiler_params=pltpu.CompilerParams(
            dimension_semantics=("parallel", "parallel", "parallel",
                                 "arbitrary"),
            vmem_limit_bytes=_VMEM_LIMIT),
        cost_estimate=pl.CostEstimate(
            flops=4 * B * num_heads * N * N * D,
            transcendentals=B * num_heads * N * N,
            bytes_accessed=2 * 4 * B * N * E),
    )(q, k, v)


def multi_head_attention(x, params, num_heads):
    """Forward pass matching the PyTorch MultiHeadAttention module.

    x: (B, N, E) float32.
    params: dict with wq, bq, wk, bk, wv, bv, wp, bp (nn.Linear layout).
    """
    B, N, E = x.shape
    x2d = x.reshape(B * N, E)

    # Fused Q/K/V projection (one pallas_call, one accumulator, bf16 outputs).
    q2d, k2d, v2d = pallas_qkv_projection(
        x2d, params["wq"], params["bq"], params["wk"], params["bk"],
        params["wv"], params["bv"])

    # Free reshapes only -- no 'b n (h d) <-> b h n d' transposes.
    q = q2d.reshape(B, N, E)
    k = k2d.reshape(B, N, E)
    v = v2d.reshape(B, N, E)

    out = pallas_attention(q, k, v, emb_size=E, num_heads=num_heads)  # bf16

    out2d = pallas_linear(out.reshape(B * N, E), params["wp"], params["bp"],
                          out_dtype=x.dtype)
    return out2d.reshape(B, N, E)


# ------------------------------ reference -----------------------------------

def reference_mha(x, params, num_heads):
    B, N, E = x.shape
    H = num_heads
    D = E // H

    def lin(t, w, b):
        return t @ w.T + b

    q = lin(x, params["wq"], params["bq"]).reshape(B, N, H, D).transpose(0, 2, 1, 3)
    k = lin(x, params["wk"], params["bk"]).reshape(B, N, H, D).transpose(0, 2, 1, 3)
    v = lin(x, params["wv"], params["bv"]).reshape(B, N, H, D).transpose(0, 2, 1, 3)

    energy = jnp.einsum("bhqd,bhkd->bhqk", q, k)
    att = jax.nn.softmax(energy, axis=-1) / (E ** 0.5)
    out = jnp.einsum("bhal,bhlv->bhav", att, v)
    out = out.transpose(0, 2, 1, 3).reshape(B, N, E)
    return lin(out, params["wp"], params["bp"])


# --------------------------------- main --------------------------------------

if __name__ == "__main__":
    # Small shapes consistent with the module: emb_size divisible by num_heads.
    B, N, E, H = 2, 8, 32, 4

    key = jax.random.PRNGKey(0)
    keys = jax.random.split(key, 9)
    scale = 1.0 / (E ** 0.5)

    params = {
        "wq": jax.random.normal(keys[0], (E, E), jnp.float32) * scale,
        "bq": jax.random.normal(keys[1], (E,), jnp.float32) * scale,
        "wk": jax.random.normal(keys[2], (E, E), jnp.float32) * scale,
        "bk": jax.random.normal(keys[3], (E,), jnp.float32) * scale,
        "wv": jax.random.normal(keys[4], (E, E), jnp.float32) * scale,
        "bv": jax.random.normal(keys[5], (E,), jnp.float32) * scale,
        "wp": jax.random.normal(keys[6], (E, E), jnp.float32) * scale,
        "bp": jax.random.normal(keys[7], (E,), jnp.float32) * scale,
    }
    x = jax.random.normal(keys[8], (B, N, E), jnp.float32)

    out = multi_head_attention(x, params, num_heads=H)
    out = jax.block_until_ready(out)

    ref = reference_mha(x, params, num_heads=H)
    assert out.shape == (B, N, E)
    # bf16 MXU operands + approx reciprocal -> loosened (but still tight)
    # tolerance; accumulation and softmax statistics remain f32.
    max_err = jnp.max(jnp.abs(out - ref))
    assert jnp.allclose(out, ref, atol=3e-2, rtol=3e-2), f"max err {max_err}"

    print("KERNEL_OK")
</pallas_src>

<mosaic_0001>
module attributes {stable_mosaic.version = 11 : i64} {
  func.func @qkv_projection_kernel(%arg0: i32, %arg1: i32, %arg2: memref<16x32xf32, #tpu.memory_space<vmem>>, %arg3: memref<32x96xbf16, #tpu.memory_space<vmem>>, %arg4: memref<1x96xf32, #tpu.memory_space<vmem>>, %arg5: memref<16x32xbf16, #tpu.memory_space<vmem>>, %arg6: memref<16x32xbf16, #tpu.memory_space<vmem>>, %arg7: memref<16x32xbf16, #tpu.memory_space<vmem>>, %arg8: memref<16x96xf32, #tpu.memory_space<vmem>>) attributes {dimension_semantics = [#tpu.dimension_semantics<parallel>, #tpu.dimension_semantics<arbitrary>], iteration_bounds = array<i64: 1, 1>, scalar_prefetch = 0 : i64, scratch_operands = 1 : i64, tpu.core_type = #tpu.core_type<tc>, window_params = [{transform_indices = @transform_0, window_bounds = array<i64: 16, 32>}, {transform_indices = @transform_1, window_bounds = array<i64: 32, 96>}, {pipeline_mode = #tpu.pipeline_mode<synchronous>, transform_indices = @transform_2, window_bounds = array<i64: 1, 96>}, {transform_indices = @transform_3, window_bounds = array<i64: 16, 32>}, {transform_indices = @transform_4, window_bounds = array<i64: 16, 32>}, {transform_indices = @transform_5, window_bounds = array<i64: 16, 32>}]} {
    %c0_i32 = arith.constant 0 : i32
    %0 = arith.cmpi eq, %arg1, %c0_i32 : i32
    %1 = arith.extui %0 : i1 to i32
    %c0_i32_0 = arith.constant 0 : i32
    %2 = arith.cmpi ne, %1, %c0_i32_0 : i32
    scf.if %2 {
      %cst_10 = arith.constant 0.000000e+00 : f32
      %13 = vector.broadcast %cst_10 : f32 to vector<16x96xf32>
      %c0_11 = arith.constant 0 : index
      %c0_12 = arith.constant 0 : index
      %14 = vector.load %arg8[%c0_11, %c0_12] : memref<16x96xf32, #tpu.memory_space<vmem>>, vector<16x96xf32>
      tpu.vector_store %arg8[%c0_11, %c0_12], %13 {strides = array<i32>} : memref<16x96xf32, #tpu.memory_space<vmem>>, vector<16x96xf32>,
    } else {
    }
    %c0 = arith.constant 0 : index
    %c0_1 = arith.constant 0 : index
    %3 = vector.load %arg2[%c0, %c0_1] : memref<16x32xf32, #tpu.memory_space<vmem>>, vector<16x32xf32>
    %4 = arith.truncf %3 : vector<16x32xf32> to vector<16x32xbf16>
    %c0_2 = arith.constant 0 : index
    %c0_3 = arith.constant 0 : index
    %5 = vector.load %arg8[%c0_2, %c0_3] : memref<16x96xf32, #tpu.memory_space<vmem>>, vector<16x96xf32>
    %c0_4 = arith.constant 0 : index
    %c0_5 = arith.constant 0 : index
    %6 = vector.load %arg3[%c0_4, %c0_5] : memref<32x96xbf16, #tpu.memory_space<vmem>>, vector<32x96xbf16>
    %cst = arith.constant dense<0.000000e+00> : vector<16x96xf32>
    %7 = tpu.matmul %4, %6, %cst {dimension_numbers = #tpu.dot_dimension_numbers<[1], [0], [0], [1], [0, 0, 1, 1], [], []>} : vector<16x32xbf16>, vector<32x96xbf16>, vector<16x96xf32> -> vector<16x96xf32>
    %8 = arith.addf %5, %7 : vector<16x96xf32>
    %c0_6 = arith.constant 0 : index
    %c0_7 = arith.constant 0 : index
    %9 = vector.load %arg8[%c0_6, %c0_7] : memref<16x96xf32, #tpu.memory_space<vmem>>, vector<16x96xf32>
    tpu.vector_store %arg8[%c0_6, %c0_7], %8 {strides = array<i32>} : memref<16x96xf32, #tpu.memory_space<vmem>>, vector<16x96xf32>,
    %c0_i32_8 = arith.constant 0 : i32
    %10 = arith.cmpi eq, %arg1, %c0_i32_8 : i32
    %11 = arith.extui %10 : i1 to i32
    %c0_i32_9 = arith.constant 0 : i32
    %12 = arith.cmpi ne, %11, %c0_i32_9 : i32
    scf.if %12 {
      %c0_10 = arith.constant 0 : index
      %c0_11 = arith.constant 0 : index
      %13 = vector.load %arg8[%c0_10, %c0_11] : memref<16x96xf32, #tpu.memory_space<vmem>>, vector<16x96xf32>
      %c0_12 = arith.constant 0 : index
      %c0_13 = arith.constant 0 : index
      %14 = vector.load %arg4[%c0_12, %c0_13] : memref<1x96xf32, #tpu.memory_space<vmem>>, vector<1x96xf32>
      %15 = vector.broadcast %14 : vector<1x96xf32> to vector<16x96xf32>
      %16 = arith.addf %13, %15 : vector<16x96xf32>
      %17 = vector.extract_strided_slice %16 {offsets = [0, 0], sizes = [16, 32], strides = [1, 1]} : vector<16x96xf32> to vector<16x32xf32>
      %18 = arith.truncf %17 : vector<16x32xf32> to vector<16x32xbf16>
      %c0_14 = arith.constant 0 : index
      %c0_15 = arith.constant 0 : index
      %19 = vector.load %arg5[%c0_14, %c0_15] : memref<16x32xbf16, #tpu.memory_space<vmem>>, vector<16x32xbf16>
      tpu.vector_store %arg5[%c0_14, %c0_15], %18 {strides = array<i32>} : memref<16x32xbf16, #tpu.memory_space<vmem>>, vector<16x32xbf16>,
      %20 = vector.extract_strided_slice %16 {offsets = [0, 32], sizes = [16, 32], strides = [1, 1]} : vector<16x96xf32> to vector<16x32xf32>
      %21 = arith.truncf %20 : vector<16x32xf32> to vector<16x32xbf16>
      %c0_16 = arith.constant 0 : index
      %c0_17 = arith.constant 0 : index
      %22 = vector.load %arg6[%c0_16, %c0_17] : memref<16x32xbf16, #tpu.memory_space<vmem>>, vector<16x32xbf16>
      tpu.vector_store %arg6[%c0_16, %c0_17], %21 {strides = array<i32>} : memref<16x32xbf16, #tpu.memory_space<vmem>>, vector<16x32xbf16>,
      %23 = vector.extract_strided_slice %16 {offsets = [0, 64], sizes = [16, 32], strides = [1, 1]} : vector<16x96xf32> to vector<16x32xf32>
      %24 = arith.truncf %23 : vector<16x32xf32> to vector<16x32xbf16>
      %c0_18 = arith.constant 0 : index
      %c0_19 = arith.constant 0 : index
      %25 = vector.load %arg7[%c0_18, %c0_19] : memref<16x32xbf16, #tpu.memory_space<vmem>>, vector<16x32xbf16>
      tpu.vector_store %arg7[%c0_18, %c0_19], %24 {strides = array<i32>} : memref<16x32xbf16, #tpu.memory_space<vmem>>, vector<16x32xbf16>,
    } else {
    }
    return
  }
  func.func @transform_0(%arg0: i32, %arg1: i32) -> (i32, i32) {
    %c0_i32 = arith.constant 0 : i32
    return %arg0, %arg1 : i32, i32
  }
  func.func @transform_1(%arg0: i32, %arg1: i32) -> (i32, i32) {
    %c0_i32 = arith.constant 0 : i32
    %c0_i32_0 = arith.constant 0 : i32
    return %arg1, %c0_i32 : i32, i32
  }
  func.func @transform_2(%arg0: i32, %arg1: i32) -> (i32, i32) {
    %c0_i32 = arith.constant 0 : i32
    %c0_i32_0 = arith.constant 0 : i32
    %c0_i32_1 = arith.constant 0 : i32
    return %c0_i32, %c0_i32_0 : i32, i32
  }
  func.func @transform_3(%arg0: i32, %arg1: i32) -> (i32, i32) {
    %c0_i32 = arith.constant 0 : i32
    %c0_i32_0 = arith.constant 0 : i32
    return %arg0, %c0_i32 : i32, i32
  }
  func.func @transform_4(%arg0: i32, %arg1: i32) -> (i32, i32) {
    %c0_i32 = arith.constant 0 : i32
    %c0_i32_0 = arith.constant 0 : i32
    return %arg0, %c0_i32 : i32, i32
  }
  func.func @transform_5(%arg0: i32, %arg1: i32) -> (i32, i32) {
    %c0_i32 = arith.constant 0 : i32
    %c0_i32_0 = arith.constant 0 : i32
    return %arg0, %c0_i32 : i32, i32
  }
}

</mosaic_0001>

<llo_original>
// kernel: tpu_custom_call.1
$region0: #{tpu_custom_call.1}
  #allocation0 [shape = 'u32[]', space=smem, size = 0x4, offset = 0x4, fixed_abs, tag = 'smem constant byte address 0x4 - core index']
  #allocation1 [shape = 'u32[72,128]{1,0:T(1,128)}', space=vmem, size = 0x9000, scoped, tag = 'internal scratch']
  #allocation2 [shape = 'f32[16,96]{1,0:T(8,128)}', space=vmem, size = 0x2000, scoped, tag = 'scratch operand']
  %s0 = inlined_call_operand.hbm [shape: f32[16,32], index: 0, kind: input, shape index: {}]
  %s1 = inlined_call_operand.hbm [shape: bf16[32,96], index: 1, kind: input, shape index: {}]
  %s2 = inlined_call_operand.vmem [shape: f32[1,96], index: 2, kind: input, shape index: {}]
  %s3 = inlined_call_operand.hbm [shape: bf16[16,32], index: 3, kind: output, shape index: {0}]
  %s4 = inlined_call_operand.hbm [shape: bf16[16,32], index: 4, kind: output, shape index: {1}]
  %s5 = inlined_call_operand.hbm [shape: bf16[16,32], index: 5, kind: output, shape index: {2}]
  %6 = xla_tuple %s3, %s4, %s5
  %s7 = sld [smem:[#allocation0]]
  $region54: #{tpu_custom_call.1} parent=0
    _
  %s9 = ssub.s32 1, %s7
  %s10 = scalar_select 0, %s9, %s7
  $region1: #{tpu_custom_call.1} parent=0
    #allocation3 [shape = 'u8[8192]{0}', space=vmem, size = 0x2000, scoped, tag = 'input window, operand 0, single buffered']
    #allocation4 [shape = 's32[1]{0}', space=sflag, size = 0x4, scoped, tag = 'scoped memory for tpu_custom_call.1']
    #allocation5 [shape = 's32[1]{0}', space=sflag, size = 0x4, scoped, tag = 'scoped memory for tpu_custom_call.1']
    #allocation6 [shape = 'u8[8192]{0}', space=vmem, size = 0x2000, scoped, tag = 'input window, operand 1, single buffered']
    #allocation7 [shape = 's32[1]{0}', space=sflag, size = 0x4, scoped, tag = 'scoped memory for tpu_custom_call.1']
    #allocation8 [shape = 'u8[4096]{0}', space=vmem, size = 0x1000, scoped, tag = 'output window, operand 0, single buffered']
    #allocation9 [shape = 'u8[4096]{0}', space=vmem, size = 0x1000, scoped, tag = 'output window, operand 1, single buffered']
    #allocation10 [shape = 's32[1]{0}', space=sflag, size = 0x4, scoped, tag = 'scoped memory for tpu_custom_call.1']
    #allocation11 [shape = 'u8[4096]{0}', space=vmem, size = 0x1000, scoped, tag = 'output window, operand 2, single buffered']
    %11 = vsyncpa [#allocation4], 0
    %12 = vsyncpa [#allocation7], 0
    %13 = vsyncpa [#allocation5], 0
    %14 = vsyncpa [#allocation10], 0
    // Predicated region
    $region2: #{tpu_custom_call.1} parent=1 // pred_check
      _
    $region3: #{tpu_custom_call.1} parent=1 // pred_check_branch
      %16 = sbr.rel (0) target = $region5
    $region4: #{tpu_custom_call.1} parent=1 // pred_region
      %18 = vsyncadd [#allocation4], 0
      %s19 = sshll.u32 %s0, 4
      %s20 = int_to_ptr.hbm [resolvable:$true] %s19
      %s21 = sshll.u32 [#allocation3], 4
      %s22 = int_to_ptr.vmem [resolvable:$true] %s21
      %27 = dma.hbm_to_vmem [thread:$0]  %s20, 256, %s22, [#allocation4], 128, 128, 8
    $region5: #{tpu_custom_call.1} parent=1 // pred_fallthru
      _
    // Predicated region
    $region6: #{tpu_custom_call.1} parent=1 // pred_check
      _
    $region7: #{tpu_custom_call.1} parent=1 // pred_check_branch
      %29 = sbr.rel (0) target = $region9
    $region8: #{tpu_custom_call.1} parent=1 // pred_region
      %31 = vsyncadd [#allocation7], 0
      %s32 = sshll.u32 %s1, 4
      %s33 = int_to_ptr.hbm [resolvable:$true] %s32
      %s34 = sshll.u32 [#allocation6], 4
      %s35 = int_to_ptr.vmem [resolvable:$true] %s34
      %40 = dma.hbm_to_vmem [thread:$0]  %s33, 256, %s35, [#allocation7], 64, 64, 4
    $region9: #{tpu_custom_call.1} parent=1 // pred_fallthru
      _
    // Predicated region
    $region10: #{tpu_custom_call.1} parent=1 // pred_check
      _
    $region11: #{tpu_custom_call.1} parent=1 // pred_check_branch
      %42 = sbr.rel (0) target = $region13
    $region12: #{tpu_custom_call.1} parent=1 // pred_region
      _
    $region13: #{tpu_custom_call.1} parent=1 // pred_fallthru
      _
    // Predicated region
    $region14: #{tpu_custom_call.1} parent=1 // pred_check
      _
    $region15: #{tpu_custom_call.1} parent=1 // pred_check_branch
      %44 = sbr.rel (0) target = $region17
    $region16: #{tpu_custom_call.1} parent=1 // pred_region
      %46 = dma.done [#allocation4], 256
    $region17: #{tpu_custom_call.1} parent=1 // pred_fallthru
      _
    // Predicated region
    $region18: #{tpu_custom_call.1} parent=1 // pred_check
      _
    $region19: #{tpu_custom_call.1} parent=1 // pred_check_branch
      %48 = sbr.rel (0) target = $region21
    $region20: #{tpu_custom_call.1} parent=1 // pred_region
      %50 = dma.done [#allocation7], 256
    $region21: #{tpu_custom_call.1} parent=1 // pred_fallthru
      _
    %p52 = scmp.eq.s32.totalorder 0, 0
    // Predicated region
    $region22: #{tpu_custom_call.1} parent=1 // pred_check
      %p53 = pneg %p52
    $region23: #{tpu_custom_call.1} parent=1 // pred_check_branch
      %55 = sbr.rel (%p53) target = $region25
    $region24: #{tpu_custom_call.1} parent=1 // pred_region
      %vm56 = vcmask 785408
      %57 = vst.msk [vmem:[#allocation2] sm:$0xff] %vm56, 0.0
      %58 = vst.msk [vmem:[#allocation2 + $0x8] sm:$0xff] %vm56, 0.0
    $region25: #{tpu_custom_call.1} parent=1 // pred_fallthru
      _
    %v59 = vld [vmem:[#allocation3] sm:$0xff]
    %v60 = vld [vmem:[#allocation3 + $0x8] sm:$0xff]
    %v61 = vpack.c.bf16 %v60, %v59
    %v62 = vld [vmem:[#allocation2] sm:$0xff]
    %v63 = vld [vmem:[#allocation2 + $0x8] sm:$0xff]
    %v64 = vld [vmem:[#allocation6] sm:$0xf]
    %v65 = vld [vmem:[#allocation6 + $0x4] sm:$0xf]
    %v66 = vld [vmem:[#allocation6 + $0x8] sm:$0xf]
    %v67 = vld [vmem:[#allocation6 + $0xc] sm:$0xf]
    %v72 = vunpack.c.l.b16 %v64
    %v73 = vunpack.c.l.b16 %v65
    %v74 = vunpack.c.l.b16 %v66
    %v75 = vunpack.c.l.b16 %v67
    %v76 = vpack.c.b16 %v73, %v72
    %v77 = vpack.c.b16 %v75, %v74
    %vm80 = vcmask 261120
    %v82 = vsel %vm80, %v61, 0
    %84 = vmatpush.bf16.msra.mxu0 0
    %85 = vmatpush.bf16.msra.mxu0 0
    %86 = vmatpush.bf16.msra.mxu0 0
    %87 = vmatpush.bf16.msra.mxu0 0
    %88 = vmatpush.bf16.msra.mxu0 0
    %89 = vmatpush.bf16.msra.mxu0 0
    %90 = vmatpush.bf16.msra.mxu0 %v77
    %91 = vmatpush.bf16.msra.mxu0 %v76
    %92 = vmatmul.bf16.gmra.mxu0 %v82
    %v93 = vpop.f32.mrf.mxu0
    %v94 = vadd.f32 0.0, %v93
    %v95 = vpop.f32.mrf.mxu0
    %v96 = vadd.f32 0.0, %v95
    %97 = vdwg.mxu0
    %v98 = vadd.f32 %v62, %v94
    %v99 = vadd.f32 %v63, %v96
    %vm100 = vcmask 785408
    %101 = vst.msk [vmem:[#allocation2] sm:$0xff] %vm100, %v98
    %102 = vst.msk [vmem:[#allocation2 + $0x8] sm:$0xff] %vm100, %v99
    // Predicated region
    $region26: #{tpu_custom_call.1} parent=1 // pred_check
      %p103 = pneg %p52
    $region27: #{tpu_custom_call.1} parent=1 // pred_check_branch
      %105 = sbr.rel (%p103) target = $region29
    $region28: #{tpu_custom_call.1} parent=1 // pred_region
      %v106 = vld [vmem:[#allocation2] sm:$0xff]
      %v107 = vld [vmem:[#allocation2 + $0x8] sm:$0xff]
      %v108 = vld [vmem:[%s2] sm:$0x1]
      %v110 = vperm.slane %v108, 0
      %v112 = vadd.f32 %v106, %v110
      %v113 = vadd.f32 %v107, %v110
      %v114 = vpack.c.bf16 %v112, %v112
      %v115 = vpack.c.bf16 %v113, %v113
      %vm116 = vcmask 257024
      %117 = vst.msk [vmem:[#allocation8] sm:$0xf] %vm116, %v114
      %118 = vst.msk [vmem:[#allocation8 + $0x4] sm:$0xf] %vm116, %v115
      %121 = vrot.lane.b32.xlu0 %v114, 96
      %v122 = vpop.permute.xlu0 %121
      %123 = vrot.lane.b32.xlu0 %v115, 96
      %v124 = vpop.permute.xlu0 %123
      %127 = vst.msk [vmem:[#allocation9] sm:$0xf] %vm116, %v122
      %128 = vst.msk [vmem:[#allocation9 + $0x4] sm:$0xf] %vm116, %v124
      %129 = vrot.lane.b32.xlu0 %v114, 64
      %v130 = vpop.permute.xlu0 %129
      %131 = vrot.lane.b32.xlu0 %v115, 64
      %v132 = vpop.permute.xlu0 %131
      %135 = vst.msk [vmem:[#allocation11] sm:$0xf] %vm116, %v130
      %136 = vst.msk [vmem:[#allocation11 + $0x4] sm:$0xf] %vm116, %v132
    $region29: #{tpu_custom_call.1} parent=1 // pred_fallthru
      _
    // Predicated region
    $region30: #{tpu_custom_call.1} parent=1 // pred_check
      _
    $region31: #{tpu_custom_call.1} parent=1 // pred_check_branch
      %138 = sbr.rel (0) target = $region33
    $region32: #{tpu_custom_call.1} parent=1 // pred_region
      %140 = vsyncadd [#allocation5], 0
      %s141 = sshll.u32 [#allocation8], 4
      %s142 = int_to_ptr.vmem [resolvable:$true] %s141
      %s143 = sshll.u32 %s3, 4
      %s144 = int_to_ptr.hbm [resolvable:$true] %s143
      %149 = dma.vmem_to_hbm [thread:$0]  %s142, 128, %s144, [#allocation5], 64, 64, 4
    $region33: #{tpu_custom_call.1} parent=1 // pred_fallthru
      _
    // Predicated region
    $region34: #{tpu_custom_call.1} parent=1 // pred_check
      _
    $region35: #{tpu_custom_call.1} parent=1 // pred_check_branch
      %151 = sbr.rel (0) target = $region37
    $region36: #{tpu_custom_call.1} parent=1 // pred_region
      %153 = vsyncadd [#allocation10], 0
      %s154 = sshll.u32 [#allocation9], 4
      %s155 = int_to_ptr.vmem [resolvable:$true] %s154
      %s156 = sshll.u32 %s4, 4
      %s157 = int_to_ptr.hbm [resolvable:$true] %s156
      %162 = dma.vmem_to_hbm [thread:$0]  %s155, 128, %s157, [#allocation10], 64, 64, 4
    $region37: #{tpu_custom_call.1} parent=1 // pred_fallthru
      _
    // Predicated region
    $region38: #{tpu_custom_call.1} parent=1 // pred_check
      _
    $region39: #{tpu_custom_call.1} parent=1 // pred_check_branch
      %164 = sbr.rel (0) target = $region41
    $region40: #{tpu_custom_call.1} parent=1 // pred_region
      %166 = vsyncadd [#allocation10], 0
      %s167 = sshll.u32 [#allocation11], 4
      %s168 = int_to_ptr.vmem [resolvable:$true] %s167
      %s169 = sshll.u32 %s5, 4
      %s170 = int_to_ptr.hbm [resolvable:$true] %s169
      %175 = dma.vmem_to_hbm [thread:$0]  %s168, 128, %s170, [#allocation10], 64, 64, 4
    $region41: #{tpu_custom_call.1} parent=1 // pred_fallthru
      _
    // Predicated region
    $region42: #{tpu_custom_call.1} parent=1 // pred_check
      _
    $region43: #{tpu_custom_call.1} parent=1 // pred_check_branch
      %177 = sbr.rel (0) target = $region45
    $region44: #{tpu_custom_call.1} parent=1 // pred_region
      %179 = dma.done [#allocation5], 128
    $region45: #{tpu_custom_call.1} parent=1 // pred_fallthru
      _
    // Predicated region
    $region46: #{tpu_custom_call.1} parent=1 // pred_check
      _
    $region47: #{tpu_custom_call.1} parent=1 // pred_check_branch
      %181 = sbr.rel (0) target = $region49
    $region48: #{tpu_custom_call.1} parent=1 // pred_region
      %183 = dma.done [#allocation10], 128
    $region49: #{tpu_custom_call.1} parent=1 // pred_fallthru
      _
    // Predicated region
    $region50: #{tpu_custom_call.1} parent=1 // pred_check
      _
    $region51: #{tpu_custom_call.1} parent=1 // pred_check_branch
      %185 = sbr.rel (0) target = $region53
    $region52: #{tpu_custom_call.1} parent=1 // pred_region
      %187 = dma.done [#allocation10], 128
    $region53: #{tpu_custom_call.1} parent=1 // pred_fallthru
      _
    %188 = vsyncpa [#allocation4], 1
    %189 = vsyncpa [#allocation7], 1
    %190 = vsyncpa [#allocation5], 1
    %191 = vsyncpa [#allocation10], 1

</llo_original>
